<compile_context>
chip_gen: v7x
topology: tpu7x:2x2x1
jax: 0.10.0
libtpu: 0.0.40
codegen_flags: <defaults>
</compile_context>

<pallas_src>
import functools

import jax
import jax.numpy as jnp
from jax import lax
from jax.experimental import pallas as pl
from jax.experimental.pallas import tpu as pltpu

KH = KW = 4
STRIDE = 2
PAD = 1
BN_EPS = 1e-5
LEAKY_SLOPE = 0.2

LANE = 128          # lane width: last dims kept as multiples of 128
SUBLANE_BF16 = 16   # bf16 packs 16 sublane rows per vreg


def _round_up(x, m):
    return (x + m - 1) // m * m


def _cdiv(a, b):
    return (a + b - 1) // b


def _vmem_budget_bytes():
    """Generation-aware scoped-VMEM budget: half of physical VMEM, <= 64 MiB."""
    phys = 0
    try:
        info = pltpu.get_tpu_info()
        for name in ("vmem_capacity_bytes", "vmem_bytes", "vmem_size_bytes"):
            v = getattr(info, name, None)
            if v:
                phys = int(v)
                break
    except Exception:
        phys = 0
    if not phys:
        phys = 64 * 1024 * 1024            # conservative (v7x-sized) fallback
    return int(min(phys // 2, 64 * 1024 * 1024))


# ---------- Phase A: conv-as-matmul (K-tiled) + per-tile BN partial stats ----------
def conv_stats_kernel(p_ref, w_ref, y_ref, stats_ref, acc_ref):
    # p_ref:     (TM, TK) bf16 patch tile      (pipelined over M and K grid axes)
    # w_ref:     (TK, CP) bf16 weight tile     (single-buffered resident if num_k==1)
    # y_ref:     (TM, CP) bf16 conv output     (written on the last K step)
    # stats_ref: (8,  CP) f32; row 0 = sum(y), row 1 = sum(y*y); rows 2..7 unused
    # acc_ref:   (TM, CP) f32 accumulator scratch
    k = pl.program_id(1)

    @pl.when(k == 0)
    def _():
        acc_ref[...] = jnp.zeros_like(acc_ref)

    acc_ref[...] += jnp.dot(p_ref[...], w_ref[...],
                            preferred_element_type=jnp.float32)

    @pl.when(k == pl.num_programs(1) - 1)
    def _():
        y = acc_ref[...]                              # f32 accumulator
        y_ref[...] = y.astype(y_ref.dtype)            # bf16 store (halves writeback)
        # Stats from the f32 accumulator (before downcast); direct row writes,
        # rows 2..7 are never read by the combine.
        stats_ref[0:1, :] = jnp.sum(y, axis=0, keepdims=True)
        stats_ref[1:2, :] = jnp.sum(y * y, axis=0, keepdims=True)


# ---------- Phase B: fused BN affine (scale/bias) + LeakyReLU ----------
def bn_lrelu_kernel(y_ref, scale_ref, bias_ref, out_ref):
    # scale = gamma * rsqrt(var + eps); bias = beta - mean * scale (folded in wrapper)
    z = y_ref[...].astype(jnp.float32) * scale_ref[...] + bias_ref[...]
    out_ref[...] = jnp.where(z > 0, z, LEAKY_SLOPE * z).astype(out_ref.dtype)


def im2col_nhwc(x_nhwc):
    """k=4, s=2, p=1 patches -> (N*Ho*Wo, KH*KW*Cin), feature order (kh, kw, ci)."""
    n, h, w, cin = x_nhwc.shape
    ho = (h + 2 * PAD - KH) // STRIDE + 1
    wo = (w + 2 * PAD - KW) // STRIDE + 1
    xp = jnp.pad(x_nhwc, ((0, 0), (PAD, PAD), (PAD, PAD), (0, 0)))
    cols = []
    for kh in range(KH):
        for kw in range(KW):
            cols.append(xp[:, kh:kh + STRIDE * ho:STRIDE,
                            kw:kw + STRIDE * wo:STRIDE, :])    # (N, Ho, Wo, Cin)
    patches = jnp.stack(cols, axis=3)                          # (N, Ho, Wo, KH*KW, Cin)
    return patches.reshape(n * ho * wo, KH * KW * cin), (n, ho, wo)


@functools.partial(jax.jit, static_argnames=("tile_m",))
def unet_down_forward(x_nchw, conv_w, gamma, beta, *, tile_m=None):
    """x_nchw: (N, Cin, H, W); conv_w: (Cout, Cin, KH, KW) (PyTorch layout)."""
    n, cin, h, w = x_nchw.shape
    cout = conv_w.shape[0]
    vmem_budget = _vmem_budget_bytes()

    # bf16 activations from the start so the layout pass + im2col move 2 B/elem.
    x_nhwc = jnp.transpose(x_nchw.astype(jnp.bfloat16), (0, 2, 3, 1))
    patches, (_, ho, wo) = im2col_nhwc(x_nhwc)                  # (M, K) bf16
    m, k = patches.shape

    # --- lane-dense padding & tiling -------------------------------------------
    # Cout: 256-aligned when big enough to matter (2x256 MXU), else 128.
    cp = _round_up(cout, 256) if cout >= 256 else _round_up(cout, LANE)

    kp = _round_up(k, LANE)
    if kp > 4096:                      # K-tile deep layers; keeps tm large in VMEM
        tk = 2048
        kp = _round_up(kp, tk)
    else:
        tk = kp
    num_k = kp // tk

    if tile_m is None:
        tile_m = 1024 if vmem_budget >= 64 * 1024 * 1024 else 512
    # Keep >= 2 M-tiles so the 'parallel' axis can split across v7x's two cores.
    tm = max(SUBLANE_BF16, min(tile_m, _round_up(_cdiv(m, 2), SUBLANE_BF16)))
    m_pad = _round_up(m, tm)
    num_tiles = m_pad // tm

    # Zero padding is inert for the conv and the stats (we divide by the true M).
    patches_p = jnp.pad(patches, ((0, m_pad - m), (0, kp - k)))
    w_mat = jnp.transpose(conv_w, (2, 3, 1, 0)).reshape(k, cout)
    w_p = jnp.pad(w_mat, ((0, kp - k), (0, cp - cout))).astype(jnp.bfloat16)

    if num_k == 1:
        # Constant block index -> single-buffered resident weight (saves VMEM).
        w_spec = pl.BlockSpec((tk, cp), lambda i, kk: (0, 0),
                              pipeline_mode=pl.Buffered(1))
    else:
        w_spec = pl.BlockSpec((tk, cp), lambda i, kk: (kk, 0))

    cost_a = pl.CostEstimate(
        flops=2 * m_pad * kp * cp,
        transcendentals=0,
        bytes_accessed=(m_pad * kp * 2 + kp * cp * 2
                        + m_pad * cp * 2 + num_tiles * 8 * cp * 4),
    )
    y, stats = pl.pallas_call(
        conv_stats_kernel,
        grid=(num_tiles, num_k),
        in_specs=[
            pl.BlockSpec((tm, tk), lambda i, kk: (i, kk)),      # patch tile
            w_spec,                                             # weight
        ],
        out_specs=[
            pl.BlockSpec((tm, cp), lambda i, kk: (i, 0)),       # y tile (bf16)
            pl.BlockSpec((8, cp), lambda i, kk: (i, 0)),        # per-tile stats
        ],
        out_shape=[
            jax.ShapeDtypeStruct((m_pad, cp), jnp.bfloat16),
            jax.ShapeDtypeStruct((num_tiles * 8, cp), jnp.float32),
        ],
        scratch_shapes=[pltpu.VMEM((tm, cp), jnp.float32)],
        compiler_params=pltpu.CompilerParams(
            dimension_semantics=("parallel", "arbitrary"),
            vmem_limit_bytes=vmem_budget,
        ),
        cost_estimate=cost_a,
    )(patches_p, w_p)

    # --- tiny per-channel combine: fold gamma/beta into one per-channel FMA ----
    st = stats.reshape(num_tiles, 8, cp)
    ch_sum = jnp.sum(st[:, 0, :], axis=0)
    ch_sumsq = jnp.sum(st[:, 1, :], axis=0)
    mean = ch_sum / m
    var = jnp.maximum(ch_sumsq / m - mean * mean, 0.0)   # guard f32 cancellation
    inv_std = lax.rsqrt(var + BN_EPS)
    gamma_p = jnp.pad(gamma.astype(jnp.float32), (0, cp - cout))
    beta_p = jnp.pad(beta.astype(jnp.float32), (0, cp - cout))
    scale = (gamma_p * inv_std).reshape(1, cp)
    bias = (beta_p - mean * gamma_p * inv_std).reshape(1, cp)

    # --- Phase B tiling: much larger blocks (elementwise, tiny per-step VMEM) --
    factor = max(1, 4096 // tm)
    if num_tiles >= 2:
        factor = min(factor, num_tiles // 2)        # keep >= 2 tiles for megacore
    max_rows = max(tm, (vmem_budget * 3 // 4) // (cp * 2 * 4))
    factor = max(1, min(factor, max_rows // tm))
    while num_tiles % factor:                       # must divide the padded M
        factor -= 1
    tm_b = tm * factor
    num_tiles_b = num_tiles // factor

    cost_b = pl.CostEstimate(
        flops=4 * m_pad * cp,
        transcendentals=0,
        bytes_accessed=2 * m_pad * cp * 2 + 2 * cp * 4,
    )
    out_flat = pl.pallas_call(
        bn_lrelu_kernel,
        grid=(num_tiles_b,),
        in_specs=[
            pl.BlockSpec((tm_b, cp), lambda i: (i, 0)),
            pl.BlockSpec((1, cp), lambda i: (0, 0)),
            pl.BlockSpec((1, cp), lambda i: (0, 0)),
        ],
        out_specs=pl.BlockSpec((tm_b, cp), lambda i: (i, 0)),
        out_shape=jax.ShapeDtypeStruct((m_pad, cp), jnp.bfloat16),
        input_output_aliases={0: 0},                 # write result in place of y
        compiler_params=pltpu.CompilerParams(
            dimension_semantics=("parallel",),
            vmem_limit_bytes=vmem_budget,
        ),
        cost_estimate=cost_b,
    )(y, scale, bias)

    out_nhwc = out_flat[:m, :cout].reshape(n, ho, wo, cout)
    # TODO(synk): return NHWC (or fuse this repack into the consumer) to drop one
    # full activation read+write; kept here for PyTorch NCHW semantics.
    return jnp.transpose(out_nhwc, (0, 3, 1, 2)).astype(jnp.float32)


def unet_down_reference(x_nchw, conv_w, gamma, beta):
    """Pure-JAX f32 reference (PyTorch UNetDown semantics, training-mode BN)."""
    y = lax.conv_general_dilated(
        x_nchw.astype(jnp.float32), conv_w.astype(jnp.float32),
        window_strides=(STRIDE, STRIDE), padding=((PAD, PAD), (PAD, PAD)),
        dimension_numbers=("NCHW", "OIHW", "NCHW"))
    mean = jnp.mean(y, axis=(0, 2, 3), keepdims=True)
    var = jnp.mean((y - mean) ** 2, axis=(0, 2, 3), keepdims=True)
    y_hat = (y - mean) / jnp.sqrt(var + BN_EPS)
    z = y_hat * gamma.reshape(1, -1, 1, 1) + beta.reshape(1, -1, 1, 1)
    return jnp.where(z > 0, z, LEAKY_SLOPE * z)


if __name__ == "__main__":
    # Small shapes consistent with the module: N=2, Cin=4, H=W=16, Cout=8.
    N, CIN, H, W = 2, 4, 16, 16
    COUT = 8

    key = jax.random.PRNGKey(0)
    kx, kw, kg, kb = jax.random.split(key, 4)
    x = jax.random.normal(kx, (N, CIN, H, W), dtype=jnp.float32)
    conv_w = jax.random.normal(kw, (COUT, CIN, KH, KW), dtype=jnp.float32) * 0.1
    gamma = 1.0 + 0.1 * jax.random.normal(kg, (COUT,), dtype=jnp.float32)
    beta = 0.1 * jax.random.normal(kb, (COUT,), dtype=jnp.float32)

    out = jax.block_until_ready(unet_down_forward(x, conv_w, gamma, beta))
    ref = jax.block_until_ready(unet_down_reference(x, conv_w, gamma, beta))

    assert out.shape == (N, COUT, H // 2, W // 2), out.shape
    # bf16 matmul operands + bf16 y/output storage (f32 accumulation & BN stats)
    # vs pure-f32 reference -> loosened tolerance.
    assert jnp.allclose(out, ref, atol=5e-2, rtol=5e-2), float(jnp.max(jnp.abs(out - ref)))

    print("KERNEL_OK")
</pallas_src>

<mosaic_0001>
module attributes {stable_mosaic.version = 11 : i64} {
  func.func @conv_stats_kernel(%arg0: i32, %arg1: i32, %arg2: memref<64x128xbf16, #tpu.memory_space<vmem>>, %arg3: memref<128x128xbf16, #tpu.memory_space<vmem>>, %arg4: memref<64x128xbf16, #tpu.memory_space<vmem>>, %arg5: memref<8x128xf32, #tpu.memory_space<vmem>>, %arg6: memref<64x128xf32, #tpu.memory_space<vmem>>) attributes {dimension_semantics = [#tpu.dimension_semantics<parallel>, #tpu.dimension_semantics<arbitrary>], iteration_bounds = array<i64: 2, 1>, scalar_prefetch = 0 : i64, scratch_operands = 1 : i64, tpu.core_type = #tpu.core_type<tc>, window_params = [{transform_indices = @transform_0, window_bounds = array<i64: 64, 128>}, {pipeline_mode = #tpu.pipeline_mode<synchronous>, transform_indices = @transform_1, window_bounds = array<i64: 128, 128>}, {transform_indices = @transform_2, window_bounds = array<i64: 64, 128>}, {transform_indices = @transform_3, window_bounds = array<i64: 8, 128>}]} {
    %c0_i32 = arith.constant 0 : i32
    %0 = arith.cmpi eq, %arg1, %c0_i32 : i32
    %1 = arith.extui %0 : i1 to i32
    %c0_i32_0 = arith.constant 0 : i32
    %2 = arith.cmpi ne, %1, %c0_i32_0 : i32
    scf.if %2 {
      %cst_10 = arith.constant 0.000000e+00 : f32
      %12 = vector.broadcast %cst_10 : f32 to vector<64x128xf32>
      %c0_11 = arith.constant 0 : index
      %c0_12 = arith.constant 0 : index
      %13 = vector.load %arg6[%c0_11, %c0_12] : memref<64x128xf32, #tpu.memory_space<vmem>>, vector<64x128xf32>
      tpu.vector_store %arg6[%c0_11, %c0_12], %12 {strides = array<i32>} : memref<64x128xf32, #tpu.memory_space<vmem>>, vector<64x128xf32>,
    } else {
    }
    %c0 = arith.constant 0 : index
    %c0_1 = arith.constant 0 : index
    %3 = vector.load %arg6[%c0, %c0_1] : memref<64x128xf32, #tpu.memory_space<vmem>>, vector<64x128xf32>
    %c0_2 = arith.constant 0 : index
    %c0_3 = arith.constant 0 : index
    %4 = vector.load %arg2[%c0_2, %c0_3] : memref<64x128xbf16, #tpu.memory_space<vmem>>, vector<64x128xbf16>
    %c0_4 = arith.constant 0 : index
    %c0_5 = arith.constant 0 : index
    %5 = vector.load %arg3[%c0_4, %c0_5] : memref<128x128xbf16, #tpu.memory_space<vmem>>, vector<128x128xbf16>
    %cst = arith.constant dense<0.000000e+00> : vector<64x128xf32>
    %6 = tpu.matmul %4, %5, %cst {dimension_numbers = #tpu.dot_dimension_numbers<[1], [0], [0], [1], [0, 0, 1, 1], [], []>} : vector<64x128xbf16>, vector<128x128xbf16>, vector<64x128xf32> -> vector<64x128xf32>
    %7 = arith.addf %3, %6 : vector<64x128xf32>
    %c0_6 = arith.constant 0 : index
    %c0_7 = arith.constant 0 : index
    %8 = vector.load %arg6[%c0_6, %c0_7] : memref<64x128xf32, #tpu.memory_space<vmem>>, vector<64x128xf32>
    tpu.vector_store %arg6[%c0_6, %c0_7], %7 {strides = array<i32>} : memref<64x128xf32, #tpu.memory_space<vmem>>, vector<64x128xf32>,
    %c0_i32_8 = arith.constant 0 : i32
    %9 = arith.cmpi eq, %arg1, %c0_i32_8 : i32
    %10 = arith.extui %9 : i1 to i32
    %c0_i32_9 = arith.constant 0 : i32
    %11 = arith.cmpi ne, %10, %c0_i32_9 : i32
    scf.if %11 {
      %c0_10 = arith.constant 0 : index
      %c0_11 = arith.constant 0 : index
      %12 = vector.load %arg6[%c0_10, %c0_11] : memref<64x128xf32, #tpu.memory_space<vmem>>, vector<64x128xf32>
      %13 = arith.truncf %12 : vector<64x128xf32> to vector<64x128xbf16>
      %c0_12 = arith.constant 0 : index
      %c0_13 = arith.constant 0 : index
      %14 = vector.load %arg4[%c0_12, %c0_13] : memref<64x128xbf16, #tpu.memory_space<vmem>>, vector<64x128xbf16>
      tpu.vector_store %arg4[%c0_12, %c0_13], %13 {strides = array<i32>} : memref<64x128xbf16, #tpu.memory_space<vmem>>, vector<64x128xbf16>,
      %cst_14 = arith.constant dense<0.000000e+00> : vector<128xf32>
      %15 = vector.multi_reduction <add>, %12, %cst_14 [0] : vector<64x128xf32> to vector<128xf32>
      %16 = vector.shape_cast %15 : vector<128xf32> to vector<1x128xf32>
      %c0_15 = arith.constant 0 : index
      %c0_16 = arith.constant 0 : index
      %17 = vector.load %arg5[%c0_15, %c0_16] : memref<8x128xf32, #tpu.memory_space<vmem>>, vector<1x128xf32>
      tpu.vector_store %arg5[%c0_15, %c0_16], %16 {strides = array<i32>} : memref<8x128xf32, #tpu.memory_space<vmem>>, vector<1x128xf32>,
      %18 = arith.mulf %12, %12 : vector<64x128xf32>
      %cst_17 = arith.constant dense<0.000000e+00> : vector<128xf32>
      %19 = vector.multi_reduction <add>, %18, %cst_17 [0] : vector<64x128xf32> to vector<128xf32>
      %20 = vector.shape_cast %19 : vector<128xf32> to vector<1x128xf32>
      %c1 = arith.constant 1 : index
      %c0_18 = arith.constant 0 : index
      %21 = vector.load %arg5[%c1, %c0_18] : memref<8x128xf32, #tpu.memory_space<vmem>>, vector<1x128xf32>
      tpu.vector_store %arg5[%c1, %c0_18], %20 {strides = array<i32>} : memref<8x128xf32, #tpu.memory_space<vmem>>, vector<1x128xf32>,
    } else {
    }
    return
  }
  func.func @transform_0(%arg0: i32, %arg1: i32) -> (i32, i32) {
    %c0_i32 = arith.constant 0 : i32
    return %arg0, %arg1 : i32, i32
  }
  func.func @transform_1(%arg0: i32, %arg1: i32) -> (i32, i32) {
    %c0_i32 = arith.constant 0 : i32
    %c0_i32_0 = arith.constant 0 : i32
    %c0_i32_1 = arith.constant 0 : i32
    return %c0_i32, %c0_i32_0 : i32, i32
  }
  func.func @transform_2(%arg0: i32, %arg1: i32) -> (i32, i32) {
    %c0_i32 = arith.constant 0 : i32
    %c0_i32_0 = arith.constant 0 : i32
    return %arg0, %c0_i32 : i32, i32
  }
  func.func @transform_3(%arg0: i32, %arg1: i32) -> (i32, i32) {
    %c0_i32 = arith.constant 0 : i32
    %c0_i32_0 = arith.constant 0 : i32
    return %arg0, %c0_i32 : i32, i32
  }
}

module attributes {stable_mosaic.version = 11 : i64} {
  func.func @bn_lrelu_kernel(%arg0: i32, %arg1: memref<64x128xbf16, #tpu.memory_space<vmem>>, %arg2: memref<1x128xf32, #tpu.memory_space<vmem>>, %arg3: memref<1x128xf32, #tpu.memory_space<vmem>>, %arg4: memref<64x128xbf16, #tpu.memory_space<vmem>>) attributes {dimension_semantics = [#tpu.dimension_semantics<parallel>], iteration_bounds = array<i64: 2>, scalar_prefetch = 0 : i64, scratch_operands = 0 : i64, tpu.core_type = #tpu.core_type<tc>, window_params = [{transform_indices = @transform_0, window_bounds = array<i64: 64, 128>}, {pipeline_mode = #tpu.pipeline_mode<synchronous>, transform_indices = @transform_1, window_bounds = array<i64: 1, 128>}, {pipeline_mode = #tpu.pipeline_mode<synchronous>, transform_indices = @transform_2, window_bounds = array<i64: 1, 128>}, {transform_indices = @transform_3, window_bounds = array<i64: 64, 128>}]} {
    %c0 = arith.constant 0 : index
    %c0_0 = arith.constant 0 : index
    %0 = vector.load %arg1[%c0, %c0_0] : memref<64x128xbf16, #tpu.memory_space<vmem>>, vector<64x128xbf16>
    %1 = arith.extf %0 : vector<64x128xbf16> to vector<64x128xf32>
    %c0_1 = arith.constant 0 : index
    %c0_2 = arith.constant 0 : index
    %2 = vector.load %arg2[%c0_1, %c0_2] : memref<1x128xf32, #tpu.memory_space<vmem>>, vector<1x128xf32>
    %3 = vector.broadcast %2 : vector<1x128xf32> to vector<64x128xf32>
    %4 = arith.mulf %1, %3 : vector<64x128xf32>
    %c0_3 = arith.constant 0 : index
    %c0_4 = arith.constant 0 : index
    %5 = vector.load %arg3[%c0_3, %c0_4] : memref<1x128xf32, #tpu.memory_space<vmem>>, vector<1x128xf32>
    %6 = vector.broadcast %5 : vector<1x128xf32> to vector<64x128xf32>
    %7 = arith.addf %4, %6 : vector<64x128xf32>
    %cst = arith.constant 0.000000e+00 : f32
    %8 = vector.broadcast %cst : f32 to vector<64x128xf32>
    %9 = arith.cmpf ogt, %7, %8 : vector<64x128xf32>
    %cst_5 = arith.constant 2.000000e-01 : f32
    %10 = vector.broadcast %cst_5 : f32 to vector<64x128xf32>
    %11 = arith.mulf %10, %7 : vector<64x128xf32>
    %12 = arith.select %9, %7, %11 : vector<64x128xi1>, vector<64x128xf32>
    %13 = arith.truncf %12 : vector<64x128xf32> to vector<64x128xbf16>
    %c0_6 = arith.constant 0 : index
    %c0_7 = arith.constant 0 : index
    %14 = vector.load %arg4[%c0_6, %c0_7] : memref<64x128xbf16, #tpu.memory_space<vmem>>, vector<64x128xbf16>
    tpu.vector_store %arg4[%c0_6, %c0_7], %13 {strides = array<i32>} : memref<64x128xbf16, #tpu.memory_space<vmem>>, vector<64x128xbf16>,
    return
  }
  func.func @transform_0(%arg0: i32) -> (i32, i32) {
    %c0_i32 = arith.constant 0 : i32
    %c0_i32_0 = arith.constant 0 : i32
    return %arg0, %c0_i32 : i32, i32
  }
  func.func @transform_1(%arg0: i32) -> (i32, i32) {
    %c0_i32 = arith.constant 0 : i32
    %c0_i32_0 = arith.constant 0 : i32
    %c0_i32_1 = arith.constant 0 : i32
    return %c0_i32, %c0_i32_0 : i32, i32
  }
  func.func @transform_2(%arg0: i32) -> (i32, i32) {
    %c0_i32 = arith.constant 0 : i32
    %c0_i32_0 = arith.constant 0 : i32
    %c0_i32_1 = arith.constant 0 : i32
    return %c0_i32, %c0_i32_0 : i32, i32
  }
  func.func @transform_3(%arg0: i32) -> (i32, i32) {
    %c0_i32 = arith.constant 0 : i32
    %c0_i32_0 = arith.constant 0 : i32
    return %arg0, %c0_i32 : i32, i32
  }
}

</mosaic_0001>

<llo_original>
// kernel: unet_down_forward.3
$region0: #{unet_down_forward.3}
  #allocation0 [shape = 'u32[]', space=smem, size = 0x4, offset = 0x4, fixed_abs, tag = 'smem constant byte address 0x4 - core index']
  #allocation1 [shape = 'u32[144,128]{1,0:T(1,128)}', space=vmem, size = 0x12000, scoped, tag = 'internal scratch']
  %s0 = inlined_call_operand.vmem [shape: bf16[128,128], index: 0, kind: input, shape index: {}, may-alias: {0,3}]
  %s1 = inlined_call_operand.vmem [shape: f32[1,128], index: 1, kind: input, shape index: {}]
  %s2 = inlined_call_operand.vmem [shape: f32[1,128], index: 2, kind: input, shape index: {}]
  %s3 = inlined_call_operand.vmem [shape: bf16[128,128], index: 3, kind: output, shape index: {}, may-alias: {0,3}]
  %s4 = sld [smem:[#allocation0]]
  $region45: #{unet_down_forward.3} parent=0
    _
  %s6 = ssub.s32 1, %s4
  %s7 = scalar_select 0, %s6, %s4
  loop: start=0, step=1, limit=4
  $region2: #{unet_down_forward.3} parent=0 // loop_pre_header
    _
  $region3: #{unet_down_forward.3} parent=0 // loop_header
    %s9 = sphi 0, %s13
    %p10 = scmp.ge.s32.totalorder %s9, 4
    %s19 = sphi 0, %s21
    %s22 = sphi 0, %s19
    %s23 = sphi 0, %s22
    %s39 = sphi 0, %s23
    %s43 = sphi 0, %s43
    %s45 = sphi 0, %s43
    %s46 = sphi 0, %s45
    %s60 = sphi 0, %s46
    %s64 = sphi 0, %s64
    %s66 = sphi 0, %s64
    %s67 = sphi 0, %s66
    %s81 = sphi 0, %s67
    %s87 = sphi 0, %s89
    %s90 = sphi 0, %s87
    %s91 = sphi 0, %s90
    %s107 = sphi 0, %s91
  $region4: #{unet_down_forward.3} parent=0 // loop_header_branch
    %12 = sbr.rel (%p10) target = $region8
  $region5: #{unet_down_forward.3} parent=0 // loop_body
    %s14 = ssub.s32 %s9, 1
    %s15 = ssub.s32 %s9, 2
    %s16 = sadd.s32 %s9, 1
    %s17 = ssub.s32 %s9, %s16
    %p18 = scmp.eq.s32.totalorder %s17, 0
    %s20 = sadd.s32 %s19, 1
    %s21 = scalar_select %p18, %s19, %s20
    %p24 = pneg %p18
    %p25 = scmp.eq.s32.totalorder %s9, 1
    %p26 = por %p24, %p25
    %p27 = scmp.ne.s32.totalorder %s19, %s22
    %p28 = scmp.eq.s32.totalorder %s9, 0
    %p29 = por %p27, %p28
    %p30 = scmp.ne.s32.totalorder %s19, %s22
    %p31 = scmp.eq.s32.totalorder %s14, 1
    %p32 = por %p30, %p31
    %p33 = scmp.ne.s32.totalorder %s22, %s23
    %p34 = scmp.eq.s32.totalorder %s14, 0
    %p35 = por %p33, %p34
    %p36 = scmp.ne.s32.totalorder %s22, %s23
    %p37 = scmp.eq.s32.totalorder %s15, 1
    %p38 = por %p36, %p37
    %p40 = scmp.ne.s32.totalorder %s23, %s39
    %p41 = scmp.eq.s32.totalorder %s15, 0
    %p42 = por %p40, %p41
    %s44 = sadd.s32 %s43, 1
    %p47 = scmp.eq.s32.totalorder %s9, 1
    %p48 = scmp.ne.s32.totalorder %s43, %s45
    %p49 = scmp.eq.s32.totalorder %s9, 0
    %p50 = por %p48, %p49
    %p51 = scmp.ne.s32.totalorder %s43, %s45
    %p52 = scmp.eq.s32.totalorder %s14, 1
    %p53 = por %p51, %p52
    %p54 = scmp.ne.s32.totalorder %s45, %s46
    %p55 = scmp.eq.s32.totalorder %s14, 0
    %p56 = por %p54, %p55
    %p57 = scmp.ne.s32.totalorder %s45, %s46
    %p58 = scmp.eq.s32.totalorder %s15, 1
    %p59 = por %p57, %p58
    %p61 = scmp.ne.s32.totalorder %s46, %s60
    %p62 = scmp.eq.s32.totalorder %s15, 0
    %p63 = por %p61, %p62
    %s65 = sadd.s32 %s64, 1
    %p68 = scmp.eq.s32.totalorder %s9, 1
    %p69 = scmp.ne.s32.totalorder %s64, %s66
    %p70 = scmp.eq.s32.totalorder %s9, 0
    %p71 = por %p69, %p70
    %p72 = scmp.ne.s32.totalorder %s64, %s66
    %p73 = scmp.eq.s32.totalorder %s14, 1
    %p74 = por %p72, %p73
    %p75 = scmp.ne.s32.totalorder %s66, %s67
    %p76 = scmp.eq.s32.totalorder %s14, 0
    %p77 = por %p75, %p76
    %p78 = scmp.ne.s32.totalorder %s66, %s67
    %p79 = scmp.eq.s32.totalorder %s15, 1
    %p80 = por %p78, %p79
    %p82 = scmp.ne.s32.totalorder %s67, %s81
    %p83 = scmp.eq.s32.totalorder %s15, 0
    %p84 = por %p82, %p83
    %s85 = ssub.s32 %s9, %s16
    %p86 = scmp.eq.s32.totalorder %s85, 0
    %s88 = sadd.s32 %s87, 1
    %s89 = scalar_select %p86, %s87, %s88
    %p92 = pneg %p86
    %p93 = scmp.eq.s32.totalorder %s9, 1
    %p94 = por %p92, %p93
    %p95 = scmp.ne.s32.totalorder %s87, %s90
    %p96 = scmp.eq.s32.totalorder %s9, 0
    %p97 = por %p95, %p96
    %p98 = scmp.ne.s32.totalorder %s87, %s90
    %p99 = scmp.eq.s32.totalorder %s14, 1
    %p100 = por %p98, %p99
    %p101 = scmp.ne.s32.totalorder %s90, %s91
    %p102 = scmp.eq.s32.totalorder %s14, 0
    %p103 = por %p101, %p102
    %p104 = scmp.ne.s32.totalorder %s90, %s91
    %p105 = scmp.eq.s32.totalorder %s15, 1
    %p106 = por %p104, %p105
    %p108 = scmp.ne.s32.totalorder %s91, %s107
    %p109 = scmp.eq.s32.totalorder %s15, 0
    %p110 = por %p108, %p109
    %p111 = scmp.le.s32.totalorder 1, %s9
    %p112 = scmp.lt.s32.totalorder %s9, 3
    %p113 = pnand %p111, %p112
    %p114 = pneg %p113
    // Predicated region
    $region9: #{unet_down_forward.3} parent=5 // pred_check
      _
    $region10: #{unet_down_forward.3} parent=5 // pred_check_branch
      %116 = sbr.rel (%p113) target = $region12
    $region11: #{unet_down_forward.3} parent=5 // pred_region
      %s117 = ssub.s32 %s9, 1
      // Predicated region
      $region13: #{unet_down_forward.3} parent=11 // pred_check
        %p118 = pneg %p56
      $region14: #{unet_down_forward.3} parent=11 // pred_check_branch
        %120 = sbr.rel (%p118) target = $region16
      $region15: #{unet_down_forward.3} parent=11 // pred_region
        _
      $region16: #{unet_down_forward.3} parent=11 // pred_fallthru
        _
      // Predicated region
      $region17: #{unet_down_forward.3} parent=11 // pred_check
        %p121 = pneg %p77
      $region18: #{unet_down_forward.3} parent=11 // pred_check_branch
        %123 = sbr.rel (%p121) target = $region20
      $region19: #{unet_down_forward.3} parent=11 // pred_region
        _
      $region20: #{unet_down_forward.3} parent=11 // pred_fallthru
        _
    $region12: #{unet_down_forward.3} parent=5 // pred_fallthru
      _
    %p124 = scmp.lt.s32.totalorder %s9, 2
    // Predicated region
    $region21: #{unet_down_forward.3} parent=5 // pred_check
      %p125 = pneg %p124
    $region22: #{unet_down_forward.3} parent=5 // pred_check_branch
      %127 = sbr.rel (%p125) target = $region24
    $region23: #{unet_down_forward.3} parent=5 // pred_region
      // Predicated region
      $region25: #{unet_down_forward.3} parent=23 // pred_check
        %p128 = pneg %p29
      $region26: #{unet_down_forward.3} parent=23 // pred_check_branch
        %130 = sbr.rel (%p128) target = $region28
      $region27: #{unet_down_forward.3} parent=23 // pred_region
        %s131 = smul.u32 8, %s9
        %p132 = scmp.lt.s32.totalorder %s131, 15
        %s133 = scalar_select %p132, %s131, 15
        %s134 = smul.addr %s133, 4
        %s135 = scalar_lea.vmem %s0, %s134
        %s136 = smul.u32 8, %s9
      $region28: #{unet_down_forward.3} parent=23 // pred_fallthru
        _
    $region24: #{unet_down_forward.3} parent=5 // pred_fallthru
      _
    %p137 = scmp.le.s32.totalorder 1, %s9
    %p138 = scmp.lt.s32.totalorder %s9, 3
    %p139 = pnand %p137, %p138
    %p140 = pneg %p139
    // Predicated region
    $region29: #{unet_down_forward.3} parent=5 // pred_check
      _
    $region30: #{unet_down_forward.3} parent=5 // pred_check_branch
      %142 = sbr.rel (%p139) target = $region32
    $region31: #{unet_down_forward.3} parent=5 // pred_region
      %s143 = ssub.s32 %s9, 1
      %s144 = smul.u32 8, %s14
      %p145 = scmp.lt.s32.totalorder %s144, 15
      %s146 = scalar_select %p145, %s144, 15
      %s147 = smul.addr %s146, 4
      %s148 = scalar_lea.vmem %s0, %s147
      %p149 = pneg %p35
      %p150 = pneg %p32
      %p151 = pneg %p56
      %p152 = pneg %p53
      %p153 = pneg %p77
      %p154 = pneg %p74
      %p155 = pneg %p103
      %p156 = pneg %p100
      %s157 = smul.u32 8, %s14
      %p158 = scmp.lt.s32.totalorder %s157, 15
      %s159 = scalar_select %p158, %s157, 15
      %s160 = smul.addr %s159, 4
      %s161 = scalar_lea.vmem %s3, %s160
      %s162 = smul.u32 8, %s14
      %p163 = scmp.lt.s32.totalorder %s162, 15
      %s164 = scalar_select %p163, %s162, 15
      %s165 = smul.addr %s164, 4
      %s166 = scalar_lea.vmem %s0, %s165
      %s167 = smul.u32 8, %s14
      %s168 = smul.u32 8, %s14
      %p169 = scmp.lt.s32.totalorder %s168, 15
      %s170 = scalar_select %p169, %s168, 15
      %s171 = smul.addr %s170, 4
      %s172 = scalar_lea.vmem %s3, %s171
      %s173 = smul.u32 8, %s14
      %v174 = vld [vmem:[%s166] sm:$0xf]
      %v175 = vld [vmem:[%s166 + $0x4] sm:$0xf]
      %v176 = vld [vmem:[%s166 + $0x8] sm:$0xf]
      %v177 = vld [vmem:[%s166 + $0xc] sm:$0xf]
      %v178 = vld [vmem:[%s166 + $0x10] sm:$0xf]
      %v179 = vld [vmem:[%s166 + $0x14] sm:$0xf]
      %v180 = vld [vmem:[%s166 + $0x18] sm:$0xf]
      %v181 = vld [vmem:[%s166 + $0x1c] sm:$0xf]
      %v182 = vunpack.c.l.bf16 %v174
      %v183 = vunpack.c.l.bf16 %v175
      %v184 = vunpack.c.l.bf16 %v176
      %v185 = vunpack.c.l.bf16 %v177
      %v186 = vunpack.c.l.bf16 %v178
      %v187 = vunpack.c.l.bf16 %v179
      %v188 = vunpack.c.l.bf16 %v180
      %v189 = vunpack.c.l.bf16 %v181
      %v190 = vld [vmem:[%s1] sm:$0x1]
      %v192 = vlaneseq
      %v193 = vshrl.u32 %v192, 7
      %v194 = vsub.s32 0, %v193
      %v195 = vrot.slane %v190, %v194
      %v197 = vmul.f32 %v182, %v195
      %v198 = vmul.f32 %v183, %v195
      %v199 = vmul.f32 %v184, %v195
      %v200 = vmul.f32 %v185, %v195
      %v201 = vmul.f32 %v186, %v195
      %v202 = vmul.f32 %v187, %v195
      %v203 = vmul.f32 %v188, %v195
      %v204 = vmul.f32 %v189, %v195
      %v205 = vld [vmem:[%s2] sm:$0x1]
      %v207 = vlaneseq
      %v208 = vshrl.u32 %v207, 7
      %v209 = vsub.s32 0, %v208
      %v210 = vrot.slane %v205, %v209
      %v212 = vadd.f32 %v197, %v210
      %v213 = vadd.f32 %v198, %v210
      %v214 = vadd.f32 %v199, %v210
      %v215 = vadd.f32 %v200, %v210
      %v216 = vadd.f32 %v201, %v210
      %v217 = vadd.f32 %v202, %v210
      %v218 = vadd.f32 %v203, %v210
      %v219 = vadd.f32 %v204, %v210
      %vm220 = vcmp.gt.f32.partialorder %v212, 0.0
      %vm221 = vcmp.gt.f32.partialorder %v213, 0.0
      %vm222 = vcmp.gt.f32.partialorder %v214, 0.0
      %vm223 = vcmp.gt.f32.partialorder %v215, 0.0
      %vm224 = vcmp.gt.f32.partialorder %v216, 0.0
      %vm225 = vcmp.gt.f32.partialorder %v217, 0.0
      %vm226 = vcmp.gt.f32.partialorder %v218, 0.0
      %vm227 = vcmp.gt.f32.partialorder %v219, 0.0
      %v228 = vmul.f32 %v212, 0.2
      %v229 = vmul.f32 %v213, 0.2
      %v230 = vmul.f32 %v214, 0.2
      %v231 = vmul.f32 %v215, 0.2
      %v232 = vmul.f32 %v216, 0.2
      %v233 = vmul.f32 %v217, 0.2
      %v234 = vmul.f32 %v218, 0.2
      %v235 = vmul.f32 %v219, 0.2
      %v236 = vsel %vm220, %v212, %v228
      %v237 = vsel %vm221, %v213, %v229
      %v238 = vsel %vm222, %v214, %v230
      %v239 = vsel %vm223, %v215, %v231
      %v240 = vsel %vm224, %v216, %v232
      %v241 = vsel %vm225, %v217, %v233
      %v242 = vsel %vm226, %v218, %v234
      %v243 = vsel %vm227, %v219, %v235
      %v244 = vpack.c.bf16 %v237, %v236
      %v245 = vpack.c.bf16 %v239, %v238
      %v246 = vpack.c.bf16 %v241, %v240
      %v247 = vpack.c.bf16 %v243, %v242
      %v252 = vunpack.c.l.b16 %v244
      %v253 = vunpack.c.h.b16 %v244
      %v254 = vunpack.c.l.b16 %v245
      %v255 = vunpack.c.h.b16 %v245
      %v256 = vunpack.c.l.b16 %v246
      %v257 = vunpack.c.h.b16 %v246
      %v258 = vunpack.c.l.b16 %v247
      %v259 = vunpack.c.h.b16 %v247
      %v260 = vpack.c.b16 %v252, %v252
      %v261 = vpack.c.b16 %v253, %v253
      %v262 = vpack.c.b16 %v254, %v254
      %v263 = vpack.c.b16 %v255, %v255
      %v264 = vpack.c.b16 %v256, %v256
      %v265 = vpack.c.b16 %v257, %v257
      %v266 = vpack.c.b16 %v258, %v258
      %v267 = vpack.c.b16 %v259, %v259
      %276 = vst [vmem:[%s172] sm:$0xf] %v260
      %277 = vst [vmem:[%s172 + $0x4] sm:$0xf] %v261
      %278 = vst [vmem:[%s172 + $0x8] sm:$0xf] %v262
      %279 = vst [vmem:[%s172 + $0xc] sm:$0xf] %v263
      %280 = vst [vmem:[%s172 + $0x10] sm:$0xf] %v264
      %281 = vst [vmem:[%s172 + $0x14] sm:$0xf] %v265
      %282 = vst [vmem:[%s172 + $0x18] sm:$0xf] %v266
      %283 = vst [vmem:[%s172 + $0x1c] sm:$0xf] %v267
      %s284 = smul.u32 8, %s14
      %p285 = scmp.lt.s32.totalorder %s284, 15
      %s286 = scalar_select %p285, %s284, 15
      %s287 = smul.addr %s286, 4
      %s288 = scalar_lea.vmem %s3, %s287
      // Predicated region
      $region33: #{unet_down_forward.3} parent=31 // pred_check
        %p289 = pneg %p100
      $region34: #{unet_down_forward.3} parent=31 // pred_check_branch
        %291 = sbr.rel (%p289) target = $region36
      $region35: #{unet_down_forward.3} parent=31 // pred_region
        %s292 = smul.u32 8, %s14
      $region36: #{unet_down_forward.3} parent=31 // pred_fallthru
        _
    $region32: #{unet_down_forward.3} parent=5 // pred_fallthru
      _
    %p293 = scmp.le.s32.totalorder 2, %s9
    // Predicated region
    $region37: #{unet_down_forward.3} parent=5 // pred_check
      %p294 = pneg %p293
    $region38: #{unet_down_forward.3} parent=5 // pred_check_branch
      %296 = sbr.rel (%p294) target = $region40
    $region39: #{unet_down_forward.3} parent=5 // pred_region
      %s297 = ssub.s32 %s9, 2
      // Predicated region
      $region41: #{unet_down_forward.3} parent=39 // pred_check
        %p298 = pneg %p106
      $region42: #{unet_down_forward.3} parent=39 // pred_check_branch
        %300 = sbr.rel (%p298) target = $region44
      $region43: #{unet_down_forward.3} parent=39 // pred_region
        %s301 = smul.u32 8, %s15
        %p302 = scmp.lt.s32.totalorder %s301, 15
        %s303 = scalar_select %p302, %s301, 15
        %s304 = smul.addr %s303, 4
        %s305 = scalar_lea.vmem %s3, %s304
      $region44: #{unet_down_forward.3} parent=39 // pred_fallthru
        _
    $region40: #{unet_down_forward.3} parent=5 // pred_fallthru
      _
  $region6: #{unet_down_forward.3} parent=0 // loop_footer
    %s13 = sadd.s32 1, %s9
  $region7: #{unet_down_forward.3} parent=0 // loop_footer_branch
    %8 = sbr.rel target = $region3
  $region8: #{unet_down_forward.3} parent=0 // loop_exit
    _

// kernel: unet_down_forward.2
$region0: #{unet_down_forward.2}
  #allocation0 [shape = 'u32[]', space=smem, size = 0x4, offset = 0x4, fixed_abs, tag = 'smem constant byte address 0x4 - core index']
  #allocation1 [shape = 'u32[144,128]{1,0:T(1,128)}', space=vmem, size = 0x12000, scoped, tag = 'internal scratch']
  #allocation2 [shape = 'f32[64,128]{1,0:T(8,128)}', space=vmem, size = 0x8000, scoped, tag = 'scratch operand']
  %s0 = inlined_call_operand.vmem [shape: bf16[128,128], index: 0, kind: input, shape index: {}]
  %s1 = inlined_call_operand.vmem [shape: bf16[128,128], index: 1, kind: input, shape index: {}]
  %s2 = inlined_call_operand.vmem [shape: bf16[128,128], index: 2, kind: output, shape index: {0}]
  %s3 = inlined_call_operand.vmem [shape: f32[16,128], index: 3, kind: output, shape index: {1}]
  %4 = xla_tuple %s2, %s3
  %s5 = sld [smem:[#allocation0]]
  $region57: #{unet_down_forward.2} parent=0
    _
  %s7 = ssub.s32 1, %s5
  %s8 = scalar_select 0, %s7, %s5
  loop: start=0, step=1, limit=4
  $region2: #{unet_down_forward.2} parent=0 // loop_pre_header
    _
  $region3: #{unet_down_forward.2} parent=0 // loop_header
    %s10 = sphi 0, %s14
    %p11 = scmp.ge.s32.totalorder %s10, 4
    %s17 = sphi 0, %s29
    %s18 = sphi 0, %s25
    %s19 = sphi 0, %s17
    %s20 = sphi 0, %s18
    %s21 = sphi 0, %s19
    %s22 = sphi 0, %s20
    %s34 = sphi 0, %s36
    %s37 = sphi 0, %s34
    %s38 = sphi 0, %s37
    %s54 = sphi 0, %s38
    %s58 = sphi 0, %s58
    %s60 = sphi 0, %s58
    %s61 = sphi 0, %s60
    %s75 = sphi 0, %s61
    %s81 = sphi 0, %s83
    %s84 = sphi 0, %s81
    %s85 = sphi 0, %s84
    %s101 = sphi 0, %s85
    %s107 = sphi 0, %s109
    %s110 = sphi 0, %s107
    %s111 = sphi 0, %s110
    %s127 = sphi 0, %s111
  $region4: #{unet_down_forward.2} parent=0 // loop_header_branch
    %13 = sbr.rel (%p11) target = $region8
  $region5: #{unet_down_forward.2} parent=0 // loop_body
    %s15 = ssub.s32 %s10, 1
    %s16 = ssub.s32 %s10, 2
    %s23 = sadd.s32 1, %s18
    %p24 = scmp.ge.s32.totalorder %s23, 1
    %s25 = scalar_select %p24, 0, %s23
    %s26 = sadd.s32 1, %s17
    %s27 = scalar_select %p24, %s26, %s17
    %p28 = scmp.ge.s32.totalorder %s27, 2
    %s29 = scalar_select %p28, 0, %s27
    %s30 = ssub.s32 %s17, %s29
    %s31 = ssub.s32 %s18, %s25
    %s32 = sor.u32 %s30, %s31
    %p33 = scmp.eq.s32.totalorder %s32, 0
    %s35 = sadd.s32 %s34, 1
    %s36 = scalar_select %p33, %s34, %s35
    %p39 = pneg %p33
    %p40 = scmp.eq.s32.totalorder %s10, 1
    %p41 = por %p39, %p40
    %p42 = scmp.ne.s32.totalorder %s34, %s37
    %p43 = scmp.eq.s32.totalorder %s10, 0
    %p44 = por %p42, %p43
    %p45 = scmp.ne.s32.totalorder %s34, %s37
    %p46 = scmp.eq.s32.totalorder %s15, 1
    %p47 = por %p45, %p46
    %p48 = scmp.ne.s32.totalorder %s37, %s38
    %p49 = scmp.eq.s32.totalorder %s15, 0
    %p50 = por %p48, %p49
    %p51 = scmp.ne.s32.totalorder %s37, %s38
    %p52 = scmp.eq.s32.totalorder %s16, 1
    %p53 = por %p51, %p52
    %p55 = scmp.ne.s32.totalorder %s38, %s54
    %p56 = scmp.eq.s32.totalorder %s16, 0
    %p57 = por %p55, %p56
    %s59 = sadd.s32 %s58, 1
    %p62 = scmp.eq.s32.totalorder %s10, 1
    %p63 = scmp.ne.s32.totalorder %s58, %s60
    %p64 = scmp.eq.s32.totalorder %s10, 0
    %p65 = por %p63, %p64
    %p66 = scmp.ne.s32.totalorder %s58, %s60
    %p67 = scmp.eq.s32.totalorder %s15, 1
    %p68 = por %p66, %p67
    %p69 = scmp.ne.s32.totalorder %s60, %s61
    %p70 = scmp.eq.s32.totalorder %s15, 0
    %p71 = por %p69, %p70
    %p72 = scmp.ne.s32.totalorder %s60, %s61
    %p73 = scmp.eq.s32.totalorder %s16, 1
    %p74 = por %p72, %p73
    %p76 = scmp.ne.s32.totalorder %s61, %s75
    %p77 = scmp.eq.s32.totalorder %s16, 0
    %p78 = por %p76, %p77
    %s79 = ssub.s32 %s17, %s29
    %p80 = scmp.eq.s32.totalorder %s79, 0
    %s82 = sadd.s32 %s81, 1
    %s83 = scalar_select %p80, %s81, %s82
    %p86 = pneg %p80
    %p87 = scmp.eq.s32.totalorder %s10, 1
    %p88 = por %p86, %p87
    %p89 = scmp.ne.s32.totalorder %s81, %s84
    %p90 = scmp.eq.s32.totalorder %s10, 0
    %p91 = por %p89, %p90
    %p92 = scmp.ne.s32.totalorder %s81, %s84
    %p93 = scmp.eq.s32.totalorder %s15, 1
    %p94 = por %p92, %p93
    %p95 = scmp.ne.s32.totalorder %s84, %s85
    %p96 = scmp.eq.s32.totalorder %s15, 0
    %p97 = por %p95, %p96
    %p98 = scmp.ne.s32.totalorder %s84, %s85
    %p99 = scmp.eq.s32.totalorder %s16, 1
    %p100 = por %p98, %p99
    %p102 = scmp.ne.s32.totalorder %s85, %s101
    %p103 = scmp.eq.s32.totalorder %s16, 0
    %p104 = por %p102, %p103
    %s105 = ssub.s32 %s17, %s29
    %p106 = scmp.eq.s32.totalorder %s105, 0
    %s108 = sadd.s32 %s107, 1
    %s109 = scalar_select %p106, %s107, %s108
    %p112 = pneg %p106
    %p113 = scmp.eq.s32.totalorder %s10, 1
    %p114 = por %p112, %p113
    %p115 = scmp.ne.s32.totalorder %s107, %s110
    %p116 = scmp.eq.s32.totalorder %s10, 0
    %p117 = por %p115, %p116
    %p118 = scmp.ne.s32.totalorder %s107, %s110
    %p119 = scmp.eq.s32.totalorder %s15, 1
    %p120 = por %p118, %p119
    %p121 = scmp.ne.s32.totalorder %s110, %s111
    %p122 = scmp.eq.s32.totalorder %s15, 0
    %p123 = por %p121, %p122
    %p124 = scmp.ne.s32.totalorder %s110, %s111
    %p125 = scmp.eq.s32.totalorder %s16, 1
    %p126 = por %p124, %p125
    %p128 = scmp.ne.s32.totalorder %s111, %s127
    %p129 = scmp.eq.s32.totalorder %s16, 0
    %p130 = por %p128, %p129
    %p131 = scmp.le.s32.totalorder 1, %s10
    %p132 = scmp.lt.s32.totalorder %s10, 3
    %p133 = pnand %p131, %p132
    %p134 = pneg %p133
    // Predicated region
    $region9: #{unet_down_forward.2} parent=5 // pred_check
      _
    $region10: #{unet_down_forward.2} parent=5 // pred_check_branch
      %136 = sbr.rel (%p133) target = $region12
    $region11: #{unet_down_forward.2} parent=5 // pred_region
      %s137 = ssub.s32 %s10, 1
      // Predicated region
      $region13: #{unet_down_forward.2} parent=11 // pred_check
        %p138 = pneg %p71
      $region14: #{unet_down_forward.2} parent=11 // pred_check_branch
        %140 = sbr.rel (%p138) target = $region16
      $region15: #{unet_down_forward.2} parent=11 // pred_region
        _
      $region16: #{unet_down_forward.2} parent=11 // pred_fallthru
        _
    $region12: #{unet_down_forward.2} parent=5 // pred_fallthru
      _
    %p141 = scmp.lt.s32.totalorder %s10, 2
    // Predicated region
    $region17: #{unet_down_forward.2} parent=5 // pred_check
      %p142 = pneg %p141
    $region18: #{unet_down_forward.2} parent=5 // pred_check_branch
      %144 = sbr.rel (%p142) target = $region20
    $region19: #{unet_down_forward.2} parent=5 // pred_region
      // Predicated region
      $region21: #{unet_down_forward.2} parent=19 // pred_check
        %p145 = pneg %p44
      $region22: #{unet_down_forward.2} parent=19 // pred_check_branch
        %147 = sbr.rel (%p145) target = $region24
      $region23: #{unet_down_forward.2} parent=19 // pred_region
        %s148 = smul.u32 8, %s17
        %p149 = scmp.lt.s32.totalorder %s148, 15
        %s150 = scalar_select %p149, %s148, 15
        %p151 = scmp.lt.s32.totalorder %s18, 0
        %s152 = scalar_select %p151, %s18, 0
        %s153 = sadd.s32 %s152, %s150
        %s154 = smul.addr %s153, 4
        %s155 = scalar_lea.vmem %s0, %s154
        %s156 = smul.u32 8, %s17
      $region24: #{unet_down_forward.2} parent=19 // pred_fallthru
        _
    $region20: #{unet_down_forward.2} parent=5 // pred_fallthru
      _
    %p157 = scmp.le.s32.totalorder 1, %s10
    %p158 = scmp.lt.s32.totalorder %s10, 3
    %p159 = pnand %p157, %p158
    %p160 = pneg %p159
    // Predicated region
    $region25: #{unet_down_forward.2} parent=5 // pred_check
      _
    $region26: #{unet_down_forward.2} parent=5 // pred_check_branch
      %162 = sbr.rel (%p159) target = $region28
    $region27: #{unet_down_forward.2} parent=5 // pred_region
      %s163 = ssub.s32 %s10, 1
      %s164 = smul.u32 8, %s19
      %p165 = scmp.lt.s32.totalorder %s164, 15
      %s166 = scalar_select %p165, %s164, 15
      %p167 = scmp.lt.s32.totalorder %s20, 0
      %s168 = scalar_select %p167, %s20, 0
      %s169 = sadd.s32 %s168, %s166
      %s170 = smul.addr %s169, 4
      %s171 = scalar_lea.vmem %s0, %s170
      %p172 = pneg %p50
      %p173 = pneg %p47
      %p174 = pneg %p71
      %p175 = pneg %p68
      %p176 = pneg %p97
      %p177 = pneg %p94
      %s178 = smul.u32 8, %s19
      %p179 = scmp.lt.s32.totalorder %s178, 15
      %s180 = scalar_select %p179, %s178, 15
      %s181 = smul.addr %s180, 4
      %s182 = scalar_lea.vmem %s2, %s181
      %p183 = pneg %p123
      %p184 = pneg %p120
      %p185 = scmp.lt.s32.totalorder %s19, 1
      %s186 = scalar_select %p185, %s19, 1
      %s187 = smul.addr %s186, 8
      %s188 = scalar_lea.vmem %s3, %s187
      %s189 = smul.u32 8, %s19
      %p190 = scmp.lt.s32.totalorder %s189, 15
      %s191 = scalar_select %p190, %s189, 15
      %p192 = scmp.lt.s32.totalorder %s20, 0
      %s193 = scalar_select %p192, %s20, 0
      %s194 = sadd.s32 %s193, %s191
      %s195 = smul.addr %s194, 4
      %s196 = scalar_lea.vmem %s0, %s195
      %s197 = smul.u32 8, %s19
      %s198 = smul.u32 8, %s19
      %p199 = scmp.lt.s32.totalorder %s198, 15
      %s200 = scalar_select %p199, %s198, 15
      %s201 = smul.addr %s200, 4
      %s202 = scalar_lea.vmem %s2, %s201
      %s203 = smul.u32 8, %s19
      %p204 = scmp.lt.s32.totalorder %s19, 1
      %s205 = scalar_select %p204, %s19, 1
      %s206 = smul.addr %s205, 8
      %s207 = scalar_lea.vmem %s3, %s206
      %p209 = scmp.eq.s32.totalorder %s20, 0
      // Predicated region
      $region29: #{unet_down_forward.2} parent=27 // pred_check
        %p210 = pneg %p209
      $region30: #{unet_down_forward.2} parent=27 // pred_check_branch
        %212 = sbr.rel (%p210) target = $region32
      $region31: #{unet_down_forward.2} parent=27 // pred_region
        %213 = vst [vmem:[#allocation2] sm:$0xff] 0.0
        %214 = vst [vmem:[#allocation2 + $0x8] sm:$0xff] 0.0
        %215 = vst [vmem:[#allocation2 + $0x10] sm:$0xff] 0.0
        %216 = vst [vmem:[#allocation2 + $0x18] sm:$0xff] 0.0
        %217 = vst [vmem:[#allocation2 + $0x20] sm:$0xff] 0.0
        %218 = vst [vmem:[#allocation2 + $0x28] sm:$0xff] 0.0
        %219 = vst [vmem:[#allocation2 + $0x30] sm:$0xff] 0.0
        %220 = vst [vmem:[#allocation2 + $0x38] sm:$0xff] 0.0
      $region32: #{unet_down_forward.2} parent=27 // pred_fallthru
        _
      %v221 = vld [vmem:[#allocation2] sm:$0xff]
      %v222 = vld [vmem:[#allocation2 + $0x8] sm:$0xff]
      %v223 = vld [vmem:[#allocation2 + $0x10] sm:$0xff]
      %v224 = vld [vmem:[#allocation2 + $0x18] sm:$0xff]
      %v225 = vld [vmem:[#allocation2 + $0x20] sm:$0xff]
      %v226 = vld [vmem:[#allocation2 + $0x28] sm:$0xff]
      %v227 = vld [vmem:[#allocation2 + $0x30] sm:$0xff]
      %v228 = vld [vmem:[#allocation2 + $0x38] sm:$0xff]
      %v229 = vld [vmem:[%s196] sm:$0xf]
      %v230 = vld [vmem:[%s196 + $0x4] sm:$0xf]
      %v231 = vld [vmem:[%s196 + $0x8] sm:$0xf]
      %v232 = vld [vmem:[%s196 + $0xc] sm:$0xf]
      %v233 = vld [vmem:[%s196 + $0x10] sm:$0xf]
      %v234 = vld [vmem:[%s196 + $0x14] sm:$0xf]
      %v235 = vld [vmem:[%s196 + $0x18] sm:$0xf]
      %v236 = vld [vmem:[%s196 + $0x1c] sm:$0xf]
      %v237 = vld [vmem:[%s1] sm:$0xf]
      %v238 = vld [vmem:[%s1 + $0x4] sm:$0xf]
      %v239 = vld [vmem:[%s1 + $0x8] sm:$0xf]
      %v240 = vld [vmem:[%s1 + $0xc] sm:$0xf]
      %v241 = vld [vmem:[%s1 + $0x10] sm:$0xf]
      %v242 = vld [vmem:[%s1 + $0x14] sm:$0xf]
      %v243 = vld [vmem:[%s1 + $0x18] sm:$0xf]
      %v244 = vld [vmem:[%s1 + $0x1c] sm:$0xf]
      %v245 = vld [vmem:[%s1 + $0x20] sm:$0xf]
      %v246 = vld [vmem:[%s1 + $0x24] sm:$0xf]
      %v247 = vld [vmem:[%s1 + $0x28] sm:$0xf]
      %v248 = vld [vmem:[%s1 + $0x2c] sm:$0xf]
      %v249 = vld [vmem:[%s1 + $0x30] sm:$0xf]
      %v250 = vld [vmem:[%s1 + $0x34] sm:$0xf]
      %v251 = vld [vmem:[%s1 + $0x38] sm:$0xf]
      %v252 = vld [vmem:[%s1 + $0x3c] sm:$0xf]
      %v261 = vunpack.c.l.b16 %v229
      %v262 = vunpack.c.l.b16 %v230
      %v263 = vunpack.c.l.b16 %v231
      %v264 = vunpack.c.l.b16 %v232
      %v265 = vunpack.c.l.b16 %v233
      %v266 = vunpack.c.l.b16 %v234
      %v267 = vunpack.c.l.b16 %v235
      %v268 = vunpack.c.l.b16 %v236
      %v269 = vpack.c.b16 %v262, %v261
      %v270 = vpack.c.b16 %v264, %v263
      %v271 = vpack.c.b16 %v266, %v265
      %v272 = vpack.c.b16 %v268, %v267
      %v293 = vunpack.c.l.b16 %v237
      %v294 = vunpack.c.l.b16 %v238
      %v295 = vunpack.c.l.b16 %v239
      %v296 = vunpack.c.l.b16 %v240
      %v297 = vunpack.c.l.b16 %v241
      %v298 = vunpack.c.l.b16 %v242
      %v299 = vunpack.c.l.b16 %v243
      %v300 = vunpack.c.l.b16 %v244
      %v301 = vunpack.c.l.b16 %v245
      %v302 = vunpack.c.l.b16 %v246
      %v303 = vunpack.c.l.b16 %v247
      %v304 = vunpack.c.l.b16 %v248
      %v305 = vunpack.c.l.b16 %v249
      %v306 = vunpack.c.l.b16 %v250
      %v307 = vunpack.c.l.b16 %v251
      %v308 = vunpack.c.l.b16 %v252
      %v309 = vpack.c.b16 %v294, %v293
      %v310 = vpack.c.b16 %v296, %v295
      %v311 = vpack.c.b16 %v298, %v297
      %v312 = vpack.c.b16 %v300, %v299
      %v313 = vpack.c.b16 %v302, %v301
      %v314 = vpack.c.b16 %v304, %v303
      %v315 = vpack.c.b16 %v306, %v305
      %v316 = vpack.c.b16 %v308, %v307
      %325 = vmatprep.subr.bf16.mxu0 0
      %326 = vmatpush1.bf16.msra.mxu0 %v309
      %327 = vmatprep.subr.bf16.mxu0 0
      %328 = vmatpush1.bf16.msra.mxu0 %v310
      %329 = vmatprep.subr.bf16.mxu0 0
      %330 = vmatpush1.bf16.msra.mxu0 %v311
      %331 = vmatprep.subr.bf16.mxu0 0
      %332 = vmatpush1.bf16.msra.mxu0 %v312
      %333 = vmatprep.subr.bf16.mxu0 0
      %334 = vmatpush1.bf16.msra.mxu0 %v313
      %335 = vmatprep.subr.bf16.mxu0 0
      %336 = vmatpush1.bf16.msra.mxu0 %v314
      %337 = vmatprep.subr.bf16.mxu0 0
      %338 = vmatpush1.bf16.msra.mxu0 %v315
      %339 = vmatprep.subr.bf16.mxu0 0
      %340 = vmatpush1.bf16.msra.mxu0 %v316
      %341 = vmatprep.subr.bf16.mxu0 0
      %342 = vmatpush1.bf16.msra.mxu0 0
      %343 = vmatprep.subr.bf16.mxu0 0
      %344 = vmatpush1.bf16.msra.mxu0 0
      %345 = vmatprep.subr.bf16.mxu0 0
      %346 = vmatpush1.bf16.msra.mxu0 0
      %347 = vmatprep.subr.bf16.mxu0 0
      %348 = vmatpush1.bf16.msra.mxu0 0
      %349 = vmatprep.subr.bf16.mxu0 0
      %350 = vmatpush1.bf16.msra.mxu0 0
      %351 = vmatprep.subr.bf16.mxu0 0
      %352 = vmatpush1.bf16.msra.mxu0 0
      %353 = vmatprep.subr.bf16.mxu0 0
      %354 = vmatpush1.bf16.msra.mxu0 0
      %355 = vmatprep.subr.bf16.mxu0 0
      %356 = vmatpush1.bf16.msra.mxu0 0
      %357 = vmatprep.mubr.bf16.mxu0 0
      %358 = vmatmul.mubr.bf16.gmra.mrb[0].mxu0 %v269
      %v359 = vpop.f32.mrb[0].mxu0
      %v360 = vadd.f32 0.0, %v359
      %v361 = vpop.f32.mrb[0].mxu0
      %v362 = vpop.f32.mrb[0].mxu0
      %v363 = vadd.f32 0.0, %v362
      %v364 = vpop.f32.mrb[0].mxu0
      %365 = vmatprep.mubr.bf16.mxu0 0
      %366 = vmatmul.mubr.bf16.gmra.mrb[0].mxu0 %v270
      %v367 = vpop.f32.mrb[0].mxu0
      %v368 = vadd.f32 0.0, %v367
      %v369 = vpop.f32.mrb[0].mxu0
      %v370 = vpop.f32.mrb[0].mxu0
      %v371 = vadd.f32 0.0, %v370
      %v372 = vpop.f32.mrb[0].mxu0
      %373 = vmatprep.mubr.bf16.mxu0 0
      %374 = vmatmul.mubr.bf16.gmra.mrb[0].mxu0 %v271
      %v375 = vpop.f32.mrb[0].mxu0
      %v376 = vadd.f32 0.0, %v375
      %v377 = vpop.f32.mrb[0].mxu0
      %v378 = vpop.f32.mrb[0].mxu0
      %v379 = vadd.f32 0.0, %v378
      %v380 = vpop.f32.mrb[0].mxu0
      %381 = vmatprep.mubr.bf16.mxu0 0
      %382 = vmatmul.mubr.bf16.gmra.mrb[0].mxu0 %v272
      %v383 = vpop.f32.mrb[0].mxu0
      %v384 = vadd.f32 0.0, %v383
      %v385 = vpop.f32.mrb[0].mxu0
      %v386 = vpop.f32.mrb[0].mxu0
      %v387 = vadd.f32 0.0, %v386
      %v388 = vpop.f32.mrb[0].mxu0
      %389 = vdwg.mxu0
      %v390 = vadd.f32 %v221, %v360
      %v391 = vadd.f32 %v222, %v363
      %v392 = vadd.f32 %v223, %v368
      %v393 = vadd.f32 %v224, %v371
      %v394 = vadd.f32 %v225, %v376
      %v395 = vadd.f32 %v226, %v379
      %v396 = vadd.f32 %v227, %v384
      %v397 = vadd.f32 %v228, %v387
      %398 = vst [vmem:[#allocation2] sm:$0xff] %v390
      %399 = vst [vmem:[#allocation2 + $0x8] sm:$0xff] %v391
      %400 = vst [vmem:[#allocation2 + $0x10] sm:$0xff] %v392
      %401 = vst [vmem:[#allocation2 + $0x18] sm:$0xff] %v393
      %402 = vst [vmem:[#allocation2 + $0x20] sm:$0xff] %v394
      %403 = vst [vmem:[#allocation2 + $0x28] sm:$0xff] %v395
      %404 = vst [vmem:[#allocation2 + $0x30] sm:$0xff] %v396
      %405 = vst [vmem:[#allocation2 + $0x38] sm:$0xff] %v397
      // Predicated region
      $region33: #{unet_down_forward.2} parent=27 // pred_check
        %p406 = pneg %p209
      $region34: #{unet_down_forward.2} parent=27 // pred_check_branch
        %408 = sbr.rel (%p406) target = $region36
      $region35: #{unet_down_forward.2} parent=27 // pred_region
        %v409 = vld [vmem:[#allocation2] sm:$0xff]
        %v410 = vld [vmem:[#allocation2 + $0x8] sm:$0xff]
        %v411 = vld [vmem:[#allocation2 + $0x10] sm:$0xff]
        %v412 = vld [vmem:[#allocation2 + $0x18] sm:$0xff]
        %v413 = vld [vmem:[#allocation2 + $0x20] sm:$0xff]
        %v414 = vld [vmem:[#allocation2 + $0x28] sm:$0xff]
        %v415 = vld [vmem:[#allocation2 + $0x30] sm:$0xff]
        %v416 = vld [vmem:[#allocation2 + $0x38] sm:$0xff]
        %v417 = vpack.c.bf16 %v410, %v409
        %v418 = vpack.c.bf16 %v412, %v411
        %v419 = vpack.c.bf16 %v414, %v413
        %v420 = vpack.c.bf16 %v416, %v415
        %v425 = vunpack.c.l.b16 %v417
        %v426 = vunpack.c.h.b16 %v417
        %v427 = vunpack.c.l.b16 %v418
        %v428 = vunpack.c.h.b16 %v418
        %v429 = vunpack.c.l.b16 %v419
        %v430 = vunpack.c.h.b16 %v419
        %v431 = vunpack.c.l.b16 %v420
        %v432 = vunpack.c.h.b16 %v420
        %v433 = vpack.c.b16 %v425, %v425
        %v434 = vpack.c.b16 %v426, %v426
        %v435 = vpack.c.b16 %v427, %v427
        %v436 = vpack.c.b16 %v428, %v428
        %v437 = vpack.c.b16 %v429, %v429
        %v438 = vpack.c.b16 %v430, %v430
        %v439 = vpack.c.b16 %v431, %v431
        %v440 = vpack.c.b16 %v432, %v432
        %449 = vst [vmem:[%s202] sm:$0xf] %v433
        %450 = vst [vmem:[%s202 + $0x4] sm:$0xf] %v434
        %451 = vst [vmem:[%s202 + $0x8] sm:$0xf] %v435
        %452 = vst [vmem:[%s202 + $0xc] sm:$0xf] %v436
        %453 = vst [vmem:[%s202 + $0x10] sm:$0xf] %v437
        %454 = vst [vmem:[%s202 + $0x14] sm:$0xf] %v438
        %455 = vst [vmem:[%s202 + $0x18] sm:$0xf] %v439
        %456 = vst [vmem:[%s202 + $0x1c] sm:$0xf] %v440
        %v457 = vadd.f32 %v409, %v410
        %v458 = vadd.f32 %v457, %v411
        %v459 = vadd.f32 %v458, %v412
        %v460 = vadd.f32 %v459, %v413
        %v461 = vadd.f32 %v460, %v414
        %v462 = vadd.f32 %v461, %v415
        %v463 = vadd.f32 %v462, %v416
        %v464 = vrot.slane %v463, 4
        %v465 = vadd.f32 %v463, %v464
        %v466 = vrot.slane %v465, 2
        %v467 = vadd.f32 %v465, %v466
        %v468 = vrot.slane %v467, 1
        %v469 = vadd.f32 %v467, %v468
        %470 = vst [vmem:[%s207] sm:$0x1] %v469
        %v471 = vmul.f32 %v409, %v409
        %v472 = vmul.f32 %v410, %v410
        %v473 = vmul.f32 %v411, %v411
        %v474 = vmul.f32 %v412, %v412
        %v475 = vmul.f32 %v413, %v413
        %v476 = vmul.f32 %v414, %v414
        %v477 = vmul.f32 %v415, %v415
        %v478 = vmul.f32 %v416, %v416
        %v479 = vadd.f32 %v471, %v472
        %v480 = vadd.f32 %v479, %v473
        %v481 = vadd.f32 %v480, %v474
        %v482 = vadd.f32 %v481, %v475
        %v483 = vadd.f32 %v482, %v476
        %v484 = vadd.f32 %v483, %v477
        %v485 = vadd.f32 %v484, %v478
        %v486 = vrot.slane %v485, 4
        %v487 = vadd.f32 %v485, %v486
        %v488 = vrot.slane %v487, 2
        %v489 = vadd.f32 %v487, %v488
        %v490 = vrot.slane %v489, 1
        %v491 = vadd.f32 %v489, %v490
        %492 = vst [vmem:[%s207 + $0x1] sm:$0x1] %v491
      $region36: #{unet_down_forward.2} parent=27 // pred_fallthru
        _
      %s493 = smul.u32 8, %s19
      %p494 = scmp.lt.s32.totalorder %s493, 15
      %s495 = scalar_select %p494, %s493, 15
      %s496 = smul.addr %s495, 4
      %s497 = scalar_lea.vmem %s2, %s496
      %p498 = scmp.lt.s32.totalorder %s19, 1
      %s499 = scalar_select %p498, %s19, 1
      %s500 = smul.addr %s499, 8
      %s501 = scalar_lea.vmem %s3, %s500
      // Predicated region
      $region37: #{unet_down_forward.2} parent=27 // pred_check
        %p502 = pneg %p94
      $region38: #{unet_down_forward.2} parent=27 // pred_check_branch
        %504 = sbr.rel (%p502) target = $region40
      $region39: #{unet_down_forward.2} parent=27 // pred_region
        %s505 = smul.u32 8, %s19
      $region40: #{unet_down_forward.2} parent=27 // pred_fallthru
        _
      // Predicated region
      $region41: #{unet_down_forward.2} parent=27 // pred_check
        %p506 = pneg %p120
      $region42: #{unet_down_forward.2} parent=27 // pred_check_branch
        %508 = sbr.rel (%p506) target = $region44
      $region43: #{unet_down_forward.2} parent=27 // pred_region
        _
      $region44: #{unet_down_forward.2} parent=27 // pred_fallthru
        _
    $region28: #{unet_down_forward.2} parent=5 // pred_fallthru
      _
    %p509 = scmp.le.s32.totalorder 2, %s10
    // Predicated region
    $region45: #{unet_down_forward.2} parent=5 // pred_check
      %p510 = pneg %p509
    $region46: #{unet_down_forward.2} parent=5 // pred_check_branch
      %512 = sbr.rel (%p510) target = $region48
    $region47: #{unet_down_forward.2} parent=5 // pred_region
      %s513 = ssub.s32 %s10, 2
      // Predicated region
      $region49: #{unet_down_forward.2} parent=47 // pred_check
        %p514 = pneg %p100
      $region50: #{unet_down_forward.2} parent=47 // pred_check_branch
        %516 = sbr.rel (%p514) target = $region52
      $region51: #{unet_down_forward.2} parent=47 // pred_region
        %s517 = smul.u32 8, %s21
        %p518 = scmp.lt.s32.totalorder %s517, 15
        %s519 = scalar_select %p518, %s517, 15
        %s520 = smul.addr %s519, 4
        %s521 = scalar_lea.vmem %s2, %s520
      $region52: #{unet_down_forward.2} parent=47 // pred_fallthru
        _
      // Predicated region
      $region53: #{unet_down_forward.2} parent=47 // pred_check
        %p522 = pneg %p126
      $region54: #{unet_down_forward.2} parent=47 // pred_check_branch
        %524 = sbr.rel (%p522) target = $region56
      $region55: #{unet_down_forward.2} parent=47 // pred_region
        %p525 = scmp.lt.s32.totalorder %s21, 1
        %s526 = scalar_select %p525, %s21, 1
        %s527 = smul.addr %s526, 8
        %s528 = scalar_lea.vmem %s3, %s527
      $region56: #{unet_down_forward.2} parent=47 // pred_fallthru
        _
    $region48: #{unet_down_forward.2} parent=5 // pred_fallthru
      _
  $region6: #{unet_down_forward.2} parent=0 // loop_footer
    %s14 = sadd.s32 1, %s10
  $region7: #{unet_down_forward.2} parent=0 // loop_footer_branch
    %9 = sbr.rel target = $region3
  $region8: #{unet_down_forward.2} parent=0 // loop_exit
    _

</llo_original>
